<compile_context>
chip_gen: v5e
topology: v5e:2x2
jax: 0.10.0
libtpu: 0.0.40
codegen_flags: <defaults>
</compile_context>

<pallas_src>
import functools

import jax
import jax.numpy as jnp
from jax.experimental import pallas as pl
from jax.experimental.pallas import tpu as pltpu


def _mlp_kernel(x_ref, w1_ref, b1_ref, w2_ref, b2_ref, w3_ref, b3_ref, o_ref):
    # Cast x in-kernel (VPU) instead of materializing a bf16 copy in HBM.
    x = x_ref[...].astype(w1_ref.dtype)

    # Layer 1: (TB, D_in) @ (D_in, H1) on the MXU, f32 accumulation.
    h1 = jnp.dot(x, w1_ref[...], preferred_element_type=jnp.float32)
    h1 = jnp.maximum(h1 + b1_ref[...], 0.0)          # bias + ReLU, f32 epilogue
    # Dropout -> identity (eval mode)

    # Layer 2: (TB, H1) @ (H1, H2) on the MXU.
    h2 = jnp.dot(h1.astype(w2_ref.dtype), w2_ref[...],
                 preferred_element_type=jnp.float32)
    h2 = jnp.maximum(h2 + b2_ref[...], 0.0)
    # Dropout -> identity (eval mode)

    # Layer 3: single output column. Keep it OFF the MXU (N=1 would waste
    # 255/256 of the columns): VPU elementwise multiply + XLU lane reduce,
    # slots that are otherwise idle here.
    logits = jnp.sum(h2 * w3_ref[...], axis=-1, keepdims=True)    # (TB, 1) f32
    logits = logits + b3_ref[0]                                    # scalar bias (SMEM)
    o_ref[...] = jax.nn.sigmoid(logits).astype(o_ref.dtype)


def _round_up(v, m):
    return ((v + m - 1) // m) * m


def _choose_tile(B, block_b):
    """Pick the batch tile: big tiles, >=2 grid steps when B>=16 (v7x megacore),
    and always either a multiple of 8 or equal to the full batch dim."""
    if B < 16:
        return B                                   # single exact (full-dim) block
    n_split = max(2, pl.cdiv(B, block_b))          # at least 2 tiles for megacore
    return max(8, _round_up(pl.cdiv(B, n_split), 8))


@functools.partial(jax.jit, static_argnames=("block_b", "compute_dtype"))
def rsc_classifier_forward(x, w1, b1, w2, b2, w3, b3, *,
                           block_b=1024, compute_dtype=jnp.bfloat16):
    """Forward pass of RSCClassifier.

    x: (B, D_in). Weights as (in_features, out_features); b1/b2: (1, H),
    w3: (H2, 1), b3: (1, 1) or (1,).
    """
    B, d_in = x.shape
    h1d = w1.shape[1]
    h2d = w2.shape[1]
    out_dtype = x.dtype

    tile = _choose_tile(B, block_b)
    n_tiles = pl.cdiv(B, tile)

    # Weights are tiny (<1 MiB total): cheap to cast in the wrapper; they stay
    # resident in VMEM (constant index_map) across all grid steps.
    w1_c = w1.astype(compute_dtype)
    w2_c = w2.astype(compute_dtype)
    w3_row = w3.reshape(1, h2d).astype(jnp.float32)   # (1, H2) row for the VPU path
    b1_r = b1.reshape(1, h1d).astype(jnp.float32)
    b2_r = b2.reshape(1, h2d).astype(jnp.float32)
    b3_s = b3.reshape(1).astype(jnp.float32)          # 1-D scalar in SMEM (no 2-D pad)

    out = pl.pallas_call(
        _mlp_kernel,
        out_shape=jax.ShapeDtypeStruct((B, 1), out_dtype),
        grid_spec=pltpu.PrefetchScalarGridSpec(
            num_scalar_prefetch=0,
            grid=(n_tiles,),
            in_specs=[
                pl.BlockSpec((tile, d_in), lambda i: (i, 0)),       # x (native dtype)
                pl.BlockSpec((d_in, h1d), lambda i: (0, 0)),        # W1 (resident)
                pl.BlockSpec((1, h1d), lambda i: (0, 0)),           # b1
                pl.BlockSpec((h1d, h2d), lambda i: (0, 0)),         # W2 (resident)
                pl.BlockSpec((1, h2d), lambda i: (0, 0)),           # b2
                pl.BlockSpec((1, h2d), lambda i: (0, 0)),           # W3 row (resident)
                pl.BlockSpec(memory_space=pltpu.MemorySpace.SMEM),  # b3 scalar
            ],
            out_specs=pl.BlockSpec((tile, 1), lambda i: (i, 0)),
        ),
        compiler_params=pltpu.CompilerParams(
            # Batch tiles are independent -> shard across TensorCores on v7x.
            dimension_semantics=("parallel",),
        ),
    )(x, w1_c, b1_r, w2_c, b2_r, w3_row, b3_s)

    return out


def init_params(key, input_dim=512, hidden_dims=(256, 128)):
    """Deterministic init mimicking nn.Linear default (U[-1/sqrt(fan_in), ...]).

    Weights stored as (in_features, out_features)."""
    dims = [input_dim, hidden_dims[0], hidden_dims[1], 1]
    params = []
    keys = jax.random.split(key, 2 * (len(dims) - 1))
    for li in range(len(dims) - 1):
        fan_in, fan_out = dims[li], dims[li + 1]
        bound = 1.0 / (fan_in ** 0.5)
        w = jax.random.uniform(keys[2 * li], (fan_in, fan_out),
                               minval=-bound, maxval=bound, dtype=jnp.float32)
        b = jax.random.uniform(keys[2 * li + 1], (1, fan_out),
                               minval=-bound, maxval=bound, dtype=jnp.float32)
        params += [w, b]
    return params


def reference_forward(x, w1, b1, w2, b2, w3, b3):
    h1 = jnp.maximum(x @ w1 + b1, 0.0)
    h2 = jnp.maximum(h1 @ w2 + b2, 0.0)
    return jax.nn.sigmoid(h2 @ w3 + b3)


if __name__ == "__main__":
    key = jax.random.PRNGKey(0)
    k_x, k_x2, k_p = jax.random.split(key, 3)

    B, INPUT_DIM = 8, 512
    HIDDEN = (256, 128)

    x = jax.random.normal(k_x, (B, INPUT_DIM), dtype=jnp.float32)
    w1, b1, w2, b2, w3, b3 = init_params(k_p, INPUT_DIM, HIDDEN)
    ref = reference_forward(x, w1, b1, w2, b2, w3, b3)

    # f32 compute path: tight check against the reference (single exact tile).
    out_f32 = rsc_classifier_forward(x, w1, b1, w2, b2, w3, b3,
                                     compute_dtype=jnp.float32)
    out_f32 = jax.block_until_ready(out_f32)
    assert out_f32.shape == (B, 1), out_f32.shape
    assert jnp.allclose(out_f32, ref, atol=1e-5, rtol=1e-5), (
        f"f32 path max abs err {jnp.max(jnp.abs(out_f32 - ref))}")

    # Default fast path: in-kernel bf16 cast, f32 accumulation/epilogue.
    out = rsc_classifier_forward(x, w1, b1, w2, b2, w3, b3)
    out = jax.block_until_ready(out)
    assert out.shape == (B, 1), out.shape
    assert jnp.allclose(out, ref, atol=2e-2, rtol=2e-2), (
        f"bf16 path max abs err {jnp.max(jnp.abs(out - ref))}")

    # Multi-tile + ragged boundary path (B=40 -> two 24-row tiles, last one
    # partial): exercises the no-pad masked-boundary handling and the
    # megacore split without any wrapper-side copy of x.
    B2 = 40
    x2 = jax.random.normal(k_x2, (B2, INPUT_DIM), dtype=jnp.float32)
    ref2 = reference_forward(x2, w1, b1, w2, b2, w3, b3)
    out2 = rsc_classifier_forward(x2, w1, b1, w2, b2, w3, b3)
    out2 = jax.block_until_ready(out2)
    assert out2.shape == (B2, 1), out2.shape
    assert jnp.allclose(out2, ref2, atol=2e-2, rtol=2e-2), (
        f"multi-tile path max abs err {jnp.max(jnp.abs(out2 - ref2))}")

    print("KERNEL_OK")
</pallas_src>

<mosaic_0001>
module attributes {stable_mosaic.version = 11 : i64} {
  func.func @_mlp_kernel(%arg0: i32, %arg1: memref<8x512xf32, #tpu.memory_space<vmem>>, %arg2: memref<512x256xf32, #tpu.memory_space<vmem>>, %arg3: memref<1x256xf32, #tpu.memory_space<vmem>>, %arg4: memref<256x128xf32, #tpu.memory_space<vmem>>, %arg5: memref<1x128xf32, #tpu.memory_space<vmem>>, %arg6: memref<1x128xf32, #tpu.memory_space<vmem>>, %arg7: memref<1xf32, #tpu.memory_space<smem>>, %arg8: memref<8x1xf32, #tpu.memory_space<vmem>>) attributes {dimension_semantics = [#tpu.dimension_semantics<parallel>], iteration_bounds = array<i64: 1>, scalar_prefetch = 0 : i64, scratch_operands = 0 : i64, tpu.core_type = #tpu.core_type<tc>, window_params = [{transform_indices = @transform_0, window_bounds = array<i64: 8, 512>}, {pipeline_mode = #tpu.pipeline_mode<synchronous>, transform_indices = @transform_1, window_bounds = array<i64: 512, 256>}, {pipeline_mode = #tpu.pipeline_mode<synchronous>, transform_indices = @transform_2, window_bounds = array<i64: 1, 256>}, {pipeline_mode = #tpu.pipeline_mode<synchronous>, transform_indices = @transform_3, window_bounds = array<i64: 256, 128>}, {pipeline_mode = #tpu.pipeline_mode<synchronous>, transform_indices = @transform_4, window_bounds = array<i64: 1, 128>}, {pipeline_mode = #tpu.pipeline_mode<synchronous>, transform_indices = @transform_5, window_bounds = array<i64: 1, 128>}, {transform_indices = @transform_6, window_bounds = array<i64: 1>}, {transform_indices = @transform_7, window_bounds = array<i64: 8, 1>}]} {
    %c0 = arith.constant 0 : index
    %c0_0 = arith.constant 0 : index
    %0 = vector.load %arg1[%c0, %c0_0] : memref<8x512xf32, #tpu.memory_space<vmem>>, vector<8x512xf32>
    %c0_1 = arith.constant 0 : index
    %c0_2 = arith.constant 0 : index
    %1 = vector.load %arg2[%c0_1, %c0_2] : memref<512x256xf32, #tpu.memory_space<vmem>>, vector<512x256xf32>
    %cst = arith.constant dense<0.000000e+00> : vector<8x256xf32>
    %2 = tpu.matmul %0, %1, %cst {dimension_numbers = #tpu.dot_dimension_numbers<[1], [0], [0], [1], [0, 0, 1, 1], [], []>} : vector<8x512xf32>, vector<512x256xf32>, vector<8x256xf32> -> vector<8x256xf32>
    %c0_3 = arith.constant 0 : index
    %c0_4 = arith.constant 0 : index
    %3 = vector.load %arg3[%c0_3, %c0_4] : memref<1x256xf32, #tpu.memory_space<vmem>>, vector<1x256xf32>
    %4 = vector.broadcast %3 : vector<1x256xf32> to vector<8x256xf32>
    %5 = arith.addf %2, %4 : vector<8x256xf32>
    %cst_5 = arith.constant 0.000000e+00 : f32
    %6 = vector.broadcast %cst_5 : f32 to vector<8x256xf32>
    %7 = arith.maximumf %5, %6 : vector<8x256xf32>
    %c0_6 = arith.constant 0 : index
    %c0_7 = arith.constant 0 : index
    %8 = vector.load %arg4[%c0_6, %c0_7] : memref<256x128xf32, #tpu.memory_space<vmem>>, vector<256x128xf32>
    %cst_8 = arith.constant dense<0.000000e+00> : vector<8x128xf32>
    %9 = tpu.matmul %7, %8, %cst_8 {dimension_numbers = #tpu.dot_dimension_numbers<[1], [0], [0], [1], [0, 0, 1, 1], [], []>} : vector<8x256xf32>, vector<256x128xf32>, vector<8x128xf32> -> vector<8x128xf32>
    %c0_9 = arith.constant 0 : index
    %c0_10 = arith.constant 0 : index
    %10 = vector.load %arg5[%c0_9, %c0_10] : memref<1x128xf32, #tpu.memory_space<vmem>>, vector<1x128xf32>
    %11 = vector.broadcast %10 : vector<1x128xf32> to vector<8x128xf32>
    %12 = arith.addf %9, %11 : vector<8x128xf32>
    %cst_11 = arith.constant 0.000000e+00 : f32
    %13 = vector.broadcast %cst_11 : f32 to vector<8x128xf32>
    %14 = arith.maximumf %12, %13 : vector<8x128xf32>
    %c0_12 = arith.constant 0 : index
    %c0_13 = arith.constant 0 : index
    %15 = vector.load %arg6[%c0_12, %c0_13] : memref<1x128xf32, #tpu.memory_space<vmem>>, vector<1x128xf32>
    %16 = vector.broadcast %15 : vector<1x128xf32> to vector<8x128xf32>
    %17 = arith.mulf %14, %16 : vector<8x128xf32>
    %cst_14 = arith.constant dense<0.000000e+00> : vector<8xf32>
    %18 = vector.multi_reduction <add>, %17, %cst_14 [1] : vector<8x128xf32> to vector<8xf32>
    %19 = vector.shape_cast %18 : vector<8xf32> to vector<8x1xf32>
    %c0_15 = arith.constant 0 : index
    %20 = memref.load %arg7[%c0_15] : memref<1xf32, #tpu.memory_space<smem>>
    %21 = vector.broadcast %20 : f32 to vector<8x1xf32>
    %22 = arith.addf %19, %21 : vector<8x1xf32>
    %23 = arith.negf %22 : vector<8x1xf32>
    %24 = math.exp %23 : vector<8x1xf32>
    %cst_16 = arith.constant 1.000000e+00 : f32
    %25 = vector.broadcast %cst_16 : f32 to vector<8x1xf32>
    %26 = arith.addf %25, %24 : vector<8x1xf32>
    %27 = arith.divf %25, %26 : vector<8x1xf32>
    %c0_17 = arith.constant 0 : index
    %c0_18 = arith.constant 0 : index
    %28 = vector.load %arg8[%c0_17, %c0_18] : memref<8x1xf32, #tpu.memory_space<vmem>>, vector<8x1xf32>
    tpu.vector_store %arg8[%c0_17, %c0_18], %27 {strides = array<i32>} : memref<8x1xf32, #tpu.memory_space<vmem>>, vector<8x1xf32>,
    return
  }
  func.func @transform_0(%arg0: i32) -> (i32, i32) {
    %c0_i32 = arith.constant 0 : i32
    %c0_i32_0 = arith.constant 0 : i32
    return %arg0, %c0_i32 : i32, i32
  }
  func.func @transform_1(%arg0: i32) -> (i32, i32) {
    %c0_i32 = arith.constant 0 : i32
    %c0_i32_0 = arith.constant 0 : i32
    %c0_i32_1 = arith.constant 0 : i32
    return %c0_i32, %c0_i32_0 : i32, i32
  }
  func.func @transform_2(%arg0: i32) -> (i32, i32) {
    %c0_i32 = arith.constant 0 : i32
    %c0_i32_0 = arith.constant 0 : i32
    %c0_i32_1 = arith.constant 0 : i32
    return %c0_i32, %c0_i32_0 : i32, i32
  }
  func.func @transform_3(%arg0: i32) -> (i32, i32) {
    %c0_i32 = arith.constant 0 : i32
    %c0_i32_0 = arith.constant 0 : i32
    %c0_i32_1 = arith.constant 0 : i32
    return %c0_i32, %c0_i32_0 : i32, i32
  }
  func.func @transform_4(%arg0: i32) -> (i32, i32) {
    %c0_i32 = arith.constant 0 : i32
    %c0_i32_0 = arith.constant 0 : i32
    %c0_i32_1 = arith.constant 0 : i32
    return %c0_i32, %c0_i32_0 : i32, i32
  }
  func.func @transform_5(%arg0: i32) -> (i32, i32) {
    %c0_i32 = arith.constant 0 : i32
    %c0_i32_0 = arith.constant 0 : i32
    %c0_i32_1 = arith.constant 0 : i32
    return %c0_i32, %c0_i32_0 : i32, i32
  }
  func.func @transform_6(%arg0: i32) -> i32 {
    %c0_i32 = arith.constant 0 : i32
    %c0_i32_0 = arith.constant 0 : i32
    return %c0_i32 : i32
  }
  func.func @transform_7(%arg0: i32) -> (i32, i32) {
    %c0_i32 = arith.constant 0 : i32
    %c0_i32_0 = arith.constant 0 : i32
    return %arg0, %c0_i32 : i32, i32
  }
}

</mosaic_0001>

<llo_original>
// kernel: rsc_classifier_forward.1
$region0: #{rsc_classifier_forward.1}
  #allocation0 [shape = 'u32[]', space=smem, size = 0x4, offset = 0x4, fixed_abs, tag = 'smem constant byte address 0x4 - core index']
  #allocation1 [shape = 'u32[72,128]{1,0:T(1,128)}', space=vmem, size = 0x9000, scoped, tag = 'internal scratch']
  #allocation2 [shape = 'f32[1]{0:T(128)S(6)}', space=smem, size = 0x200, scoped, tag = 'scoped memory for rsc_classifier_forward.1']
  %s0 = inlined_call_operand.hbm [shape: f32[8,512], index: 0, kind: input, shape index: {}]
  %s1 = inlined_call_operand.hbm [shape: f32[512,256], index: 1, kind: input, shape index: {}]
  %s2 = inlined_call_operand.vmem [shape: f32[1,256], index: 2, kind: input, shape index: {}]
  %s3 = inlined_call_operand.hbm [shape: f32[256,128], index: 3, kind: input, shape index: {}]
  %s4 = inlined_call_operand.vmem [shape: f32[1,128], index: 4, kind: input, shape index: {}]
  %s5 = inlined_call_operand.vmem [shape: f32[1,128], index: 5, kind: input, shape index: {}]
  %s6 = inlined_call_operand.<no memory space> [shape: f32[1], index: 6, kind: input, shape index: {}]
  %s7 = inlined_call_operand.vmem [shape: f32[8,1], index: 7, kind: output, shape index: {}]
  %s8 = sld [smem:[#allocation0]]
  $region50: #{rsc_classifier_forward.1} parent=0
    _
  %s10 = ssub.s32 1, %s8
  %s11 = scalar_select 0, %s10, %s8
  %12 = sst [smem:[#allocation2]] %s6
  $region1: #{rsc_classifier_forward.1} parent=0
    #allocation3 [shape = 'u8[16384]{0}', space=vmem, size = 0x4000, scoped, tag = 'input window, operand 0, single buffered']
    #allocation4 [shape = 's32[1]{0}', space=sflag, size = 0x4, scoped, tag = 'scoped memory for rsc_classifier_forward.1']
    #allocation5 [shape = 'u8[524288]{0}', space=vmem, size = 0x80000, scoped, tag = 'input window, operand 1, single buffered']
    #allocation6 [shape = 's32[1]{0}', space=sflag, size = 0x4, scoped, tag = 'scoped memory for rsc_classifier_forward.1']
    #allocation7 [shape = 'u8[131072]{0}', space=vmem, size = 0x20000, scoped, tag = 'input window, operand 3, single buffered']
    %13 = vsyncpa [#allocation4], 0
    %14 = vsyncpa [#allocation6], 0
    // Predicated region
    $region2: #{rsc_classifier_forward.1} parent=1 // pred_check
      _
    $region3: #{rsc_classifier_forward.1} parent=1 // pred_check_branch
      %16 = sbr.rel (0) target = $region5
    $region4: #{rsc_classifier_forward.1} parent=1 // pred_region
      %18 = vsyncadd [#allocation4], 0
      %s20 = sshll.u32 %s0, 4
      %s21 = int_to_ptr.hbm [resolvable:$true] %s20
      %s22 = sshll.u32 [#allocation3], 4
      %s23 = int_to_ptr.vmem [resolvable:$true] %s22
      %25 = dma.hbm_to_vmem [thread:$0]  %s21, 512, %s23, [#allocation4]
    $region5: #{rsc_classifier_forward.1} parent=1 // pred_fallthru
      _
    // Predicated region
    $region6: #{rsc_classifier_forward.1} parent=1 // pred_check
      _
    $region7: #{rsc_classifier_forward.1} parent=1 // pred_check_branch
      %27 = sbr.rel (0) target = $region9
    $region8: #{rsc_classifier_forward.1} parent=1 // pred_region
      %29 = vsyncadd [#allocation6], 0
      %s30 = sshll.u32 %s1, 4
      %s31 = int_to_ptr.hbm [resolvable:$true] %s30
      %s32 = sshll.u32 [#allocation5], 4
      %s33 = int_to_ptr.vmem [resolvable:$true] %s32
      %38 = dma.hbm_to_vmem [thread:$0]  %s31, 16384, %s33, [#allocation6], 256, 256, 16
    $region9: #{rsc_classifier_forward.1} parent=1 // pred_fallthru
      _
    // Predicated region
    $region10: #{rsc_classifier_forward.1} parent=1 // pred_check
      _
    $region11: #{rsc_classifier_forward.1} parent=1 // pred_check_branch
      %40 = sbr.rel (0) target = $region13
    $region12: #{rsc_classifier_forward.1} parent=1 // pred_region
      _
    $region13: #{rsc_classifier_forward.1} parent=1 // pred_fallthru
      _
    // Predicated region
    $region14: #{rsc_classifier_forward.1} parent=1 // pred_check
      _
    $region15: #{rsc_classifier_forward.1} parent=1 // pred_check_branch
      %42 = sbr.rel (0) target = $region17
    $region16: #{rsc_classifier_forward.1} parent=1 // pred_region
      %44 = vsyncadd [#allocation6], 0
      %s45 = sshll.u32 %s3, 4
      %s46 = int_to_ptr.hbm [resolvable:$true] %s45
      %s47 = sshll.u32 [#allocation7], 4
      %s48 = int_to_ptr.vmem [resolvable:$true] %s47
      %53 = dma.hbm_to_vmem [thread:$0]  %s46, 4096, %s48, [#allocation6], 128, 128, 8
    $region17: #{rsc_classifier_forward.1} parent=1 // pred_fallthru
      _
    // Predicated region
    $region18: #{rsc_classifier_forward.1} parent=1 // pred_check
      _
    $region19: #{rsc_classifier_forward.1} parent=1 // pred_check_branch
      %55 = sbr.rel (0) target = $region21
    $region20: #{rsc_classifier_forward.1} parent=1 // pred_region
      _
    $region21: #{rsc_classifier_forward.1} parent=1 // pred_fallthru
      _
    // Predicated region
    $region22: #{rsc_classifier_forward.1} parent=1 // pred_check
      _
    $region23: #{rsc_classifier_forward.1} parent=1 // pred_check_branch
      %57 = sbr.rel (0) target = $region25
    $region24: #{rsc_classifier_forward.1} parent=1 // pred_region
      _
    $region25: #{rsc_classifier_forward.1} parent=1 // pred_fallthru
      _
    // Predicated region
    $region26: #{rsc_classifier_forward.1} parent=1 // pred_check
      _
    $region27: #{rsc_classifier_forward.1} parent=1 // pred_check_branch
      %59 = sbr.rel (0) target = $region29
    $region28: #{rsc_classifier_forward.1} parent=1 // pred_region
      _
    $region29: #{rsc_classifier_forward.1} parent=1 // pred_fallthru
      _
    // Predicated region
    $region30: #{rsc_classifier_forward.1} parent=1 // pred_check
      _
    $region31: #{rsc_classifier_forward.1} parent=1 // pred_check_branch
      %61 = sbr.rel (0) target = $region33
    $region32: #{rsc_classifier_forward.1} parent=1 // pred_region
      %63 = dma.done [#allocation4], 512
    $region33: #{rsc_classifier_forward.1} parent=1 // pred_fallthru
      _
    // Predicated region
    $region34: #{rsc_classifier_forward.1} parent=1 // pred_check
      _
    $region35: #{rsc_classifier_forward.1} parent=1 // pred_check_branch
      %65 = sbr.rel (0) target = $region37
    $region36: #{rsc_classifier_forward.1} parent=1 // pred_region
      %67 = dma.done [#allocation6], 16384
    $region37: #{rsc_classifier_forward.1} parent=1 // pred_fallthru
      _
    // Predicated region
    $region38: #{rsc_classifier_forward.1} parent=1 // pred_check
      _
    $region39: #{rsc_classifier_forward.1} parent=1 // pred_check_branch
      %69 = sbr.rel (0) target = $region41
    $region40: #{rsc_classifier_forward.1} parent=1 // pred_region
      %71 = dma.done [#allocation6], 4096
    $region41: #{rsc_classifier_forward.1} parent=1 // pred_fallthru
      _
    %v72 = vld [vmem:[#allocation3] sm:$0xff]
    %v73 = vld [vmem:[#allocation3 + $0x8] sm:$0xff]
    %v74 = vld [vmem:[#allocation3 + $0x10] sm:$0xff]
    %v75 = vld [vmem:[#allocation3 + $0x18] sm:$0xff]
    %v76 = vld [vmem:[#allocation5] sm:$0xff]
    %v77 = vld [vmem:[#allocation5 + $0x8] sm:$0xff]
    %v78 = vld [vmem:[#allocation5 + $0x10] sm:$0xff]
    %v79 = vld [vmem:[#allocation5 + $0x18] sm:$0xff]
    %v80 = vld [vmem:[#allocation5 + $0x20] sm:$0xff]
    %v81 = vld [vmem:[#allocation5 + $0x28] sm:$0xff]
    %v82 = vld [vmem:[#allocation5 + $0x30] sm:$0xff]
    %v83 = vld [vmem:[#allocation5 + $0x38] sm:$0xff]
    %v84 = vld [vmem:[#allocation5 + $0x40] sm:$0xff]
    %v85 = vld [vmem:[#allocation5 + $0x48] sm:$0xff]
    %v86 = vld [vmem:[#allocation5 + $0x50] sm:$0xff]
    %v87 = vld [vmem:[#allocation5 + $0x58] sm:$0xff]
    %v88 = vld [vmem:[#allocation5 + $0x60] sm:$0xff]
    %v89 = vld [vmem:[#allocation5 + $0x68] sm:$0xff]
    %v90 = vld [vmem:[#allocation5 + $0x70] sm:$0xff]
    %v91 = vld [vmem:[#allocation5 + $0x78] sm:$0xff]
    %v92 = vld [vmem:[#allocation5 + $0x80] sm:$0xff]
    %v93 = vld [vmem:[#allocation5 + $0x88] sm:$0xff]
    %v94 = vld [vmem:[#allocation5 + $0x90] sm:$0xff]
    %v95 = vld [vmem:[#allocation5 + $0x98] sm:$0xff]
    %v96 = vld [vmem:[#allocation5 + $0xa0] sm:$0xff]
    %v97 = vld [vmem:[#allocation5 + $0xa8] sm:$0xff]
    %v98 = vld [vmem:[#allocation5 + $0xb0] sm:$0xff]
    %v99 = vld [vmem:[#allocation5 + $0xb8] sm:$0xff]
    %v100 = vld [vmem:[#allocation5 + $0xc0] sm:$0xff]
    %v101 = vld [vmem:[#allocation5 + $0xc8] sm:$0xff]
    %v102 = vld [vmem:[#allocation5 + $0xd0] sm:$0xff]
    %v103 = vld [vmem:[#allocation5 + $0xd8] sm:$0xff]
    %v104 = vld [vmem:[#allocation5 + $0xe0] sm:$0xff]
    %v105 = vld [vmem:[#allocation5 + $0xe8] sm:$0xff]
    %v106 = vld [vmem:[#allocation5 + $0xf0] sm:$0xff]
    %v107 = vld [vmem:[#allocation5 + $0xf8] sm:$0xff]
    %v108 = vld [vmem:[#allocation5 + $0x100] sm:$0xff]
    %v109 = vld [vmem:[#allocation5 + $0x108] sm:$0xff]
    %v110 = vld [vmem:[#allocation5 + $0x110] sm:$0xff]
    %v111 = vld [vmem:[#allocation5 + $0x118] sm:$0xff]
    %v112 = vld [vmem:[#allocation5 + $0x120] sm:$0xff]
    %v113 = vld [vmem:[#allocation5 + $0x128] sm:$0xff]
    %v114 = vld [vmem:[#allocation5 + $0x130] sm:$0xff]
    %v115 = vld [vmem:[#allocation5 + $0x138] sm:$0xff]
    %v116 = vld [vmem:[#allocation5 + $0x140] sm:$0xff]
    %v117 = vld [vmem:[#allocation5 + $0x148] sm:$0xff]
    %v118 = vld [vmem:[#allocation5 + $0x150] sm:$0xff]
    %v119 = vld [vmem:[#allocation5 + $0x158] sm:$0xff]
    %v120 = vld [vmem:[#allocation5 + $0x160] sm:$0xff]
    %v121 = vld [vmem:[#allocation5 + $0x168] sm:$0xff]
    %v122 = vld [vmem:[#allocation5 + $0x170] sm:$0xff]
    %v123 = vld [vmem:[#allocation5 + $0x178] sm:$0xff]
    %v124 = vld [vmem:[#allocation5 + $0x180] sm:$0xff]
    %v125 = vld [vmem:[#allocation5 + $0x188] sm:$0xff]
    %v126 = vld [vmem:[#allocation5 + $0x190] sm:$0xff]
    %v127 = vld [vmem:[#allocation5 + $0x198] sm:$0xff]
    %v128 = vld [vmem:[#allocation5 + $0x1a0] sm:$0xff]
    %v129 = vld [vmem:[#allocation5 + $0x1a8] sm:$0xff]
    %v130 = vld [vmem:[#allocation5 + $0x1b0] sm:$0xff]
    %v131 = vld [vmem:[#allocation5 + $0x1b8] sm:$0xff]
    %v132 = vld [vmem:[#allocation5 + $0x1c0] sm:$0xff]
    %v133 = vld [vmem:[#allocation5 + $0x1c8] sm:$0xff]
    %v134 = vld [vmem:[#allocation5 + $0x1d0] sm:$0xff]
    %v135 = vld [vmem:[#allocation5 + $0x1d8] sm:$0xff]
    %v136 = vld [vmem:[#allocation5 + $0x1e0] sm:$0xff]
    %v137 = vld [vmem:[#allocation5 + $0x1e8] sm:$0xff]
    %v138 = vld [vmem:[#allocation5 + $0x1f0] sm:$0xff]
    %v139 = vld [vmem:[#allocation5 + $0x1f8] sm:$0xff]
    %v140 = vld [vmem:[#allocation5 + $0x200] sm:$0xff]
    %v141 = vld [vmem:[#allocation5 + $0x208] sm:$0xff]
    %v142 = vld [vmem:[#allocation5 + $0x210] sm:$0xff]
    %v143 = vld [vmem:[#allocation5 + $0x218] sm:$0xff]
    %v144 = vld [vmem:[#allocation5 + $0x220] sm:$0xff]
    %v145 = vld [vmem:[#allocation5 + $0x228] sm:$0xff]
    %v146 = vld [vmem:[#allocation5 + $0x230] sm:$0xff]
    %v147 = vld [vmem:[#allocation5 + $0x238] sm:$0xff]
    %v148 = vld [vmem:[#allocation5 + $0x240] sm:$0xff]
    %v149 = vld [vmem:[#allocation5 + $0x248] sm:$0xff]
    %v150 = vld [vmem:[#allocation5 + $0x250] sm:$0xff]
    %v151 = vld [vmem:[#allocation5 + $0x258] sm:$0xff]
    %v152 = vld [vmem:[#allocation5 + $0x260] sm:$0xff]
    %v153 = vld [vmem:[#allocation5 + $0x268] sm:$0xff]
    %v154 = vld [vmem:[#allocation5 + $0x270] sm:$0xff]
    %v155 = vld [vmem:[#allocation5 + $0x278] sm:$0xff]
    %v156 = vld [vmem:[#allocation5 + $0x280] sm:$0xff]
    %v157 = vld [vmem:[#allocation5 + $0x288] sm:$0xff]
    %v158 = vld [vmem:[#allocation5 + $0x290] sm:$0xff]
    %v159 = vld [vmem:[#allocation5 + $0x298] sm:$0xff]
    %v160 = vld [vmem:[#allocation5 + $0x2a0] sm:$0xff]
    %v161 = vld [vmem:[#allocation5 + $0x2a8] sm:$0xff]
    %v162 = vld [vmem:[#allocation5 + $0x2b0] sm:$0xff]
    %v163 = vld [vmem:[#allocation5 + $0x2b8] sm:$0xff]
    %v164 = vld [vmem:[#allocation5 + $0x2c0] sm:$0xff]
    %v165 = vld [vmem:[#allocation5 + $0x2c8] sm:$0xff]
    %v166 = vld [vmem:[#allocation5 + $0x2d0] sm:$0xff]
    %v167 = vld [vmem:[#allocation5 + $0x2d8] sm:$0xff]
    %v168 = vld [vmem:[#allocation5 + $0x2e0] sm:$0xff]
    %v169 = vld [vmem:[#allocation5 + $0x2e8] sm:$0xff]
    %v170 = vld [vmem:[#allocation5 + $0x2f0] sm:$0xff]
    %v171 = vld [vmem:[#allocation5 + $0x2f8] sm:$0xff]
    %v172 = vld [vmem:[#allocation5 + $0x300] sm:$0xff]
    %v173 = vld [vmem:[#allocation5 + $0x308] sm:$0xff]
    %v174 = vld [vmem:[#allocation5 + $0x310] sm:$0xff]
    %v175 = vld [vmem:[#allocation5 + $0x318] sm:$0xff]
    %v176 = vld [vmem:[#allocation5 + $0x320] sm:$0xff]
    %v177 = vld [vmem:[#allocation5 + $0x328] sm:$0xff]
    %v178 = vld [vmem:[#allocation5 + $0x330] sm:$0xff]
    %v179 = vld [vmem:[#allocation5 + $0x338] sm:$0xff]
    %v180 = vld [vmem:[#allocation5 + $0x340] sm:$0xff]
    %v181 = vld [vmem:[#allocation5 + $0x348] sm:$0xff]
    %v182 = vld [vmem:[#allocation5 + $0x350] sm:$0xff]
    %v183 = vld [vmem:[#allocation5 + $0x358] sm:$0xff]
    %v184 = vld [vmem:[#allocation5 + $0x360] sm:$0xff]
    %v185 = vld [vmem:[#allocation5 + $0x368] sm:$0xff]
    %v186 = vld [vmem:[#allocation5 + $0x370] sm:$0xff]
    %v187 = vld [vmem:[#allocation5 + $0x378] sm:$0xff]
    %v188 = vld [vmem:[#allocation5 + $0x380] sm:$0xff]
    %v189 = vld [vmem:[#allocation5 + $0x388] sm:$0xff]
    %v190 = vld [vmem:[#allocation5 + $0x390] sm:$0xff]
    %v191 = vld [vmem:[#allocation5 + $0x398] sm:$0xff]
    %v192 = vld [vmem:[#allocation5 + $0x3a0] sm:$0xff]
    %v193 = vld [vmem:[#allocation5 + $0x3a8] sm:$0xff]
    %v194 = vld [vmem:[#allocation5 + $0x3b0] sm:$0xff]
    %v195 = vld [vmem:[#allocation5 + $0x3b8] sm:$0xff]
    %v196 = vld [vmem:[#allocation5 + $0x3c0] sm:$0xff]
    %v197 = vld [vmem:[#allocation5 + $0x3c8] sm:$0xff]
    %v198 = vld [vmem:[#allocation5 + $0x3d0] sm:$0xff]
    %v199 = vld [vmem:[#allocation5 + $0x3d8] sm:$0xff]
    %v200 = vld [vmem:[#allocation5 + $0x3e0] sm:$0xff]
    %v201 = vld [vmem:[#allocation5 + $0x3e8] sm:$0xff]
    %v202 = vld [vmem:[#allocation5 + $0x3f0] sm:$0xff]
    %v203 = vld [vmem:[#allocation5 + $0x3f8] sm:$0xff]
    %v204 = vld [vmem:[%s2] sm:$0x3]
    %v206 = vperm.slane %v204, 0
    %v207 = vperm.slane %v204, 1
    %210 = vmatpush.msra.mxu0 %v106
    %211 = vmatpush.msra.mxu0 %v104
    %212 = vmatpush.msra.mxu0 %v102
    %213 = vmatpush.msra.mxu0 %v100
    %214 = vmatpush.msra.mxu0 %v98
    %215 = vmatpush.msra.mxu0 %v96
    %216 = vmatpush.msra.mxu0 %v94
    %217 = vmatpush.msra.mxu0 %v92
    %218 = vmatpush.msra.mxu0 %v90
    %219 = vmatpush.msra.mxu0 %v88
    %220 = vmatpush.msra.mxu0 %v86
    %221 = vmatpush.msra.mxu0 %v84
    %222 = vmatpush.msra.mxu0 %v82
    %223 = vmatpush.msra.mxu0 %v80
    %224 = vmatpush.msra.mxu0 %v78
    %225 = vmatpush.msra.mxu0 %v76
    %226 = vmatmul.f32.gmra.mxu0 %v72
    %v227 = vpop.f32.mrf.mxu0
    %v228 = vadd.f32 %v206, %v227
    %229 = vdwg.mxu0
    %230 = vmatpush.msra.mxu0 %v138
    %231 = vmatpush.msra.mxu0 %v136
    %232 = vmatpush.msra.mxu0 %v134
    %233 = vmatpush.msra.mxu0 %v132
    %234 = vmatpush.msra.mxu0 %v130
    %235 = vmatpush.msra.mxu0 %v128
    %236 = vmatpush.msra.mxu0 %v126
    %237 = vmatpush.msra.mxu0 %v124
    %238 = vmatpush.msra.mxu0 %v122
    %239 = vmatpush.msra.mxu0 %v120
    %240 = vmatpush.msra.mxu0 %v118
    %241 = vmatpush.msra.mxu0 %v116
    %242 = vmatpush.msra.mxu0 %v114
    %243 = vmatpush.msra.mxu0 %v112
    %244 = vmatpush.msra.mxu0 %v110
    %245 = vmatpush.msra.mxu0 %v108
    %246 = vmatmul.f32.gmra.mxu0 %v73
    %v247 = vpop.f32.mrf.mxu0
    %v248 = vadd.f32 %v228, %v247
    %249 = vdwg.mxu0
    %250 = vmatpush.msra.mxu0 %v170
    %251 = vmatpush.msra.mxu0 %v168
    %252 = vmatpush.msra.mxu0 %v166
    %253 = vmatpush.msra.mxu0 %v164
    %254 = vmatpush.msra.mxu0 %v162
    %255 = vmatpush.msra.mxu0 %v160
    %256 = vmatpush.msra.mxu0 %v158
    %257 = vmatpush.msra.mxu0 %v156
    %258 = vmatpush.msra.mxu0 %v154
    %259 = vmatpush.msra.mxu0 %v152
    %260 = vmatpush.msra.mxu0 %v150
    %261 = vmatpush.msra.mxu0 %v148
    %262 = vmatpush.msra.mxu0 %v146
    %263 = vmatpush.msra.mxu0 %v144
    %264 = vmatpush.msra.mxu0 %v142
    %265 = vmatpush.msra.mxu0 %v140
    %266 = vmatmul.f32.gmra.mxu0 %v74
    %v267 = vpop.f32.mrf.mxu0
    %v268 = vadd.f32 %v248, %v267
    %269 = vdwg.mxu0
    %270 = vmatpush.msra.mxu0 %v202
    %271 = vmatpush.msra.mxu0 %v200
    %272 = vmatpush.msra.mxu0 %v198
    %273 = vmatpush.msra.mxu0 %v196
    %274 = vmatpush.msra.mxu0 %v194
    %275 = vmatpush.msra.mxu0 %v192
    %276 = vmatpush.msra.mxu0 %v190
    %277 = vmatpush.msra.mxu0 %v188
    %278 = vmatpush.msra.mxu0 %v186
    %279 = vmatpush.msra.mxu0 %v184
    %280 = vmatpush.msra.mxu0 %v182
    %281 = vmatpush.msra.mxu0 %v180
    %282 = vmatpush.msra.mxu0 %v178
    %283 = vmatpush.msra.mxu0 %v176
    %284 = vmatpush.msra.mxu0 %v174
    %285 = vmatpush.msra.mxu0 %v172
    %286 = vmatmul.f32.gmra.mxu0 %v75
    %v287 = vpop.f32.mrf.mxu0
    %v288 = vadd.f32 %v268, %v287
    %289 = vdwg.mxu0
    %290 = vmatpush.msra.mxu0 %v107
    %291 = vmatpush.msra.mxu0 %v105
    %292 = vmatpush.msra.mxu0 %v103
    %293 = vmatpush.msra.mxu0 %v101
    %294 = vmatpush.msra.mxu0 %v99
    %295 = vmatpush.msra.mxu0 %v97
    %296 = vmatpush.msra.mxu0 %v95
    %297 = vmatpush.msra.mxu0 %v93
    %298 = vmatpush.msra.mxu0 %v91
    %299 = vmatpush.msra.mxu0 %v89
    %300 = vmatpush.msra.mxu0 %v87
    %301 = vmatpush.msra.mxu0 %v85
    %302 = vmatpush.msra.mxu0 %v83
    %303 = vmatpush.msra.mxu0 %v81
    %304 = vmatpush.msra.mxu0 %v79
    %305 = vmatpush.msra.mxu0 %v77
    %306 = vmatmul.f32.gmra.mxu0 %v72
    %v307 = vpop.f32.mrf.mxu0
    %v308 = vadd.f32 %v207, %v307
    %309 = vdwg.mxu0
    %310 = vmatpush.msra.mxu0 %v139
    %311 = vmatpush.msra.mxu0 %v137
    %312 = vmatpush.msra.mxu0 %v135
    %313 = vmatpush.msra.mxu0 %v133
    %314 = vmatpush.msra.mxu0 %v131
    %315 = vmatpush.msra.mxu0 %v129
    %316 = vmatpush.msra.mxu0 %v127
    %317 = vmatpush.msra.mxu0 %v125
    %318 = vmatpush.msra.mxu0 %v123
    %319 = vmatpush.msra.mxu0 %v121
    %320 = vmatpush.msra.mxu0 %v119
    %321 = vmatpush.msra.mxu0 %v117
    %322 = vmatpush.msra.mxu0 %v115
    %323 = vmatpush.msra.mxu0 %v113
    %324 = vmatpush.msra.mxu0 %v111
    %325 = vmatpush.msra.mxu0 %v109
    %326 = vmatmul.f32.gmra.mxu0 %v73
    %v327 = vpop.f32.mrf.mxu0
    %v328 = vadd.f32 %v308, %v327
    %329 = vdwg.mxu0
    %330 = vmatpush.msra.mxu0 %v171
    %331 = vmatpush.msra.mxu0 %v169
    %332 = vmatpush.msra.mxu0 %v167
    %333 = vmatpush.msra.mxu0 %v165
    %334 = vmatpush.msra.mxu0 %v163
    %335 = vmatpush.msra.mxu0 %v161
    %336 = vmatpush.msra.mxu0 %v159
    %337 = vmatpush.msra.mxu0 %v157
    %338 = vmatpush.msra.mxu0 %v155
    %339 = vmatpush.msra.mxu0 %v153
    %340 = vmatpush.msra.mxu0 %v151
    %341 = vmatpush.msra.mxu0 %v149
    %342 = vmatpush.msra.mxu0 %v147
    %343 = vmatpush.msra.mxu0 %v145
    %344 = vmatpush.msra.mxu0 %v143
    %345 = vmatpush.msra.mxu0 %v141
    %346 = vmatmul.f32.gmra.mxu0 %v74
    %v347 = vpop.f32.mrf.mxu0
    %v348 = vadd.f32 %v328, %v347
    %349 = vdwg.mxu0
    %350 = vmatpush.msra.mxu0 %v203
    %351 = vmatpush.msra.mxu0 %v201
    %352 = vmatpush.msra.mxu0 %v199
    %353 = vmatpush.msra.mxu0 %v197
    %354 = vmatpush.msra.mxu0 %v195
    %355 = vmatpush.msra.mxu0 %v193
    %356 = vmatpush.msra.mxu0 %v191
    %357 = vmatpush.msra.mxu0 %v189
    %358 = vmatpush.msra.mxu0 %v187
    %359 = vmatpush.msra.mxu0 %v185
    %360 = vmatpush.msra.mxu0 %v183
    %361 = vmatpush.msra.mxu0 %v181
    %362 = vmatpush.msra.mxu0 %v179
    %363 = vmatpush.msra.mxu0 %v177
    %364 = vmatpush.msra.mxu0 %v175
    %365 = vmatpush.msra.mxu0 %v173
    %366 = vmatmul.f32.gmra.mxu0 %v75
    %v367 = vpop.f32.mrf.mxu0
    %v368 = vadd.f32 %v348, %v367
    %369 = vdwg.mxu0
    %v370 = vmax.f32 %v288, 0.0
    %v371 = vmax.f32 %v368, 0.0
    %v372 = vld [vmem:[#allocation7] sm:$0xff]
    %v373 = vld [vmem:[#allocation7 + $0x8] sm:$0xff]
    %v374 = vld [vmem:[#allocation7 + $0x10] sm:$0xff]
    %v375 = vld [vmem:[#allocation7 + $0x18] sm:$0xff]
    %v376 = vld [vmem:[#allocation7 + $0x20] sm:$0xff]
    %v377 = vld [vmem:[#allocation7 + $0x28] sm:$0xff]
    %v378 = vld [vmem:[#allocation7 + $0x30] sm:$0xff]
    %v379 = vld [vmem:[#allocation7 + $0x38] sm:$0xff]
    %v380 = vld [vmem:[#allocation7 + $0x40] sm:$0xff]
    %v381 = vld [vmem:[#allocation7 + $0x48] sm:$0xff]
    %v382 = vld [vmem:[#allocation7 + $0x50] sm:$0xff]
    %v383 = vld [vmem:[#allocation7 + $0x58] sm:$0xff]
    %v384 = vld [vmem:[#allocation7 + $0x60] sm:$0xff]
    %v385 = vld [vmem:[#allocation7 + $0x68] sm:$0xff]
    %v386 = vld [vmem:[#allocation7 + $0x70] sm:$0xff]
    %v387 = vld [vmem:[#allocation7 + $0x78] sm:$0xff]
    %v388 = vld [vmem:[#allocation7 + $0x80] sm:$0xff]
    %v389 = vld [vmem:[#allocation7 + $0x88] sm:$0xff]
    %v390 = vld [vmem:[#allocation7 + $0x90] sm:$0xff]
    %v391 = vld [vmem:[#allocation7 + $0x98] sm:$0xff]
    %v392 = vld [vmem:[#allocation7 + $0xa0] sm:$0xff]
    %v393 = vld [vmem:[#allocation7 + $0xa8] sm:$0xff]
    %v394 = vld [vmem:[#allocation7 + $0xb0] sm:$0xff]
    %v395 = vld [vmem:[#allocation7 + $0xb8] sm:$0xff]
    %v396 = vld [vmem:[#allocation7 + $0xc0] sm:$0xff]
    %v397 = vld [vmem:[#allocation7 + $0xc8] sm:$0xff]
    %v398 = vld [vmem:[#allocation7 + $0xd0] sm:$0xff]
    %v399 = vld [vmem:[#allocation7 + $0xd8] sm:$0xff]
    %v400 = vld [vmem:[#allocation7 + $0xe0] sm:$0xff]
    %v401 = vld [vmem:[#allocation7 + $0xe8] sm:$0xff]
    %v402 = vld [vmem:[#allocation7 + $0xf0] sm:$0xff]
    %v403 = vld [vmem:[#allocation7 + $0xf8] sm:$0xff]
    %v404 = vld [vmem:[%s4] sm:$0x1]
    %v406 = vperm.slane %v404, 0
    %408 = vmatpush.msra.mxu0 %v387
    %409 = vmatpush.msra.mxu0 %v386
    %410 = vmatpush.msra.mxu0 %v385
    %411 = vmatpush.msra.mxu0 %v384
    %412 = vmatpush.msra.mxu0 %v383
    %413 = vmatpush.msra.mxu0 %v382
    %414 = vmatpush.msra.mxu0 %v381
    %415 = vmatpush.msra.mxu0 %v380
    %416 = vmatpush.msra.mxu0 %v379
    %417 = vmatpush.msra.mxu0 %v378
    %418 = vmatpush.msra.mxu0 %v377
    %419 = vmatpush.msra.mxu0 %v376
    %420 = vmatpush.msra.mxu0 %v375
    %421 = vmatpush.msra.mxu0 %v374
    %422 = vmatpush.msra.mxu0 %v373
    %423 = vmatpush.msra.mxu0 %v372
    %424 = vmatmul.f32.gmra.mxu0 %v370
    %v425 = vpop.f32.mrf.mxu0
    %v426 = vadd.f32 %v406, %v425
    %427 = vdwg.mxu0
    %428 = vmatpush.msra.mxu0 %v403
    %429 = vmatpush.msra.mxu0 %v402
    %430 = vmatpush.msra.mxu0 %v401
    %431 = vmatpush.msra.mxu0 %v400
    %432 = vmatpush.msra.mxu0 %v399
    %433 = vmatpush.msra.mxu0 %v398
    %434 = vmatpush.msra.mxu0 %v397
    %435 = vmatpush.msra.mxu0 %v396
    %436 = vmatpush.msra.mxu0 %v395
    %437 = vmatpush.msra.mxu0 %v394
    %438 = vmatpush.msra.mxu0 %v393
    %439 = vmatpush.msra.mxu0 %v392
    %440 = vmatpush.msra.mxu0 %v391
    %441 = vmatpush.msra.mxu0 %v390
    %442 = vmatpush.msra.mxu0 %v389
    %443 = vmatpush.msra.mxu0 %v388
    %444 = vmatmul.f32.gmra.mxu0 %v371
    %v445 = vpop.f32.mrf.mxu0
    %v446 = vadd.f32 %v426, %v445
    %447 = vdwg.mxu0
    %v448 = vmax.f32 %v446, 0.0
    %v449 = vld [vmem:[%s5] sm:$0x1]
    %v451 = vperm.slane %v449, 0
    %v453 = vmul.f32 %v448, %v451
    %454 = vadd.xlane.f32.xlu0 %v453
    %v455 = vpop.xlane.xlu0 %454
    %s456 = sld [smem:[#allocation2]]
    %v457 = vstv %s456
    %v458 = vadd.f32 %v455, %v457
    %v459 = vxor.u32 %v458, 2147483648
    %v460 = vmul.f32 %v459, 1.442695
    %v461 = vpow.pop %v460
    %v462 = vadd.f32 %v461, 1.0
    %v463 = vrcp.pop %v462
    %v464 = vmul.f32 %v462, %v463
    %v465 = vsub.f32 1.0, %v464
    %v466 = vmul.f32 %v463, %v465
    %v467 = vadd.f32 %v463, %v466
    %vm468 = vweird.f32 %v462
    %vm469 = vweird.f32 %v463
    %vm470 = vmor %vm468, %vm469
    %v471 = vsel %vm470, %v463, %v467
    %v472 = vand.u32 2147483647, %v462
    %vm473 = vcmp.eq.f32.partialorder %v472, 8.507059e+37
    %v474 = vand.u32 %v462, 2147483648
    %v475 = vor.u32 1.1754944e-38, %v474
    %v476 = vsel %vm473, %v475, %v471
    %v477 = vmul.f32 1.0, %v476
    %vm478 = vcmask 7168
    %479 = vst.msk [vmem:[%s7] sm:$0xff] %vm478, %v477
    // Predicated region
    $region42: #{rsc_classifier_forward.1} parent=1 // pred_check
      _
    $region43: #{rsc_classifier_forward.1} parent=1 // pred_check_branch
      %481 = sbr.rel (0) target = $region45
    $region44: #{rsc_classifier_forward.1} parent=1 // pred_region
      _
    $region45: #{rsc_classifier_forward.1} parent=1 // pred_fallthru
      _
    // Predicated region
    $region46: #{rsc_classifier_forward.1} parent=1 // pred_check
      _
    $region47: #{rsc_classifier_forward.1} parent=1 // pred_check_branch
      %483 = sbr.rel (0) target = $region49
    $region48: #{rsc_classifier_forward.1} parent=1 // pred_region
      _
    $region49: #{rsc_classifier_forward.1} parent=1 // pred_fallthru
      _
    %484 = vsyncpa [#allocation4], 1
    %485 = vsyncpa [#allocation6], 1

</llo_original>
